<compile_context>
chip_gen: v5e
topology: v5e:2x2
jax: 0.10.0
libtpu: 0.0.40
codegen_flags: <defaults>
</compile_context>

<pallas_src>
import math
from functools import partial

import jax
import jax.numpy as jnp
from jax.experimental import pallas as pl
from jax.experimental.pallas import tpu as pltpu


# ---------------------------------------------------------------------------
# Fused Pallas kernel: Conv2d + BatchNorm(batch stats) + ReLU + MaxPool
# ---------------------------------------------------------------------------

def _fused_conv_bn_relu_pool_kernel(p_ref, w_ref, o_ref, *, n, hm, wm, pool_k, eps):
    m = p_ref.shape[0]                    # N * Ho * Wo conv output pixels
    cpad = o_ref.shape[-1]                # lane-dense (128-multiple) channel axis

    # ---- Conv2d: a single MXU matmul over the folded contraction dim
    # K = Cin*KH*KW (zero-padded to a lane-dense 128 multiple); f32 accumulation.
    y0 = jnp.dot(p_ref[...], w_ref[...],
                 preferred_element_type=jnp.float32)            # (M, Cpad)

    # ---- BatchNorm2d(affine=False), training-mode batch stats over all
    # M = N*Ho*Wo pixels, single pass: var = E[x^2] - E[x]^2 (biased, PyTorch).
    inv_m = 1.0 / float(m)
    mean = jnp.sum(y0, axis=0, keepdims=True) * inv_m           # (1, Cpad)
    ex2 = jnp.sum(y0 * y0, axis=0, keepdims=True) * inv_m       # (1, Cpad)
    var = ex2 - mean * mean
    y2 = jnp.maximum((y0 - mean) * jax.lax.rsqrt(var + eps), 0.0)   # BN + ReLU

    # ---- MaxPool2d: rows were pre-ordered as (dh*pool_k + dw, N, Hm, Wm), so the
    # pool window lives on the LEADING axis -> full-tile elementwise maxes and one
    # full lane-dense store.  (Splitting the leading row axis with the trailing
    # (Wm=8, Cpad=128) tile intact is a layout-identity reshape.)
    y2 = y2.reshape(pool_k * pool_k, n, hm, wm, cpad)
    pooled = y2[0]
    for t in range(1, pool_k * pool_k):
        pooled = jnp.maximum(pooled, y2[t])
    o_ref[...] = pooled                                          # (N, Hm, Wm, Cpad)


# ---------------------------------------------------------------------------
# Wrapper (tiny XLA glue; fuses into a couple of fusions under jit)
# ---------------------------------------------------------------------------

def _prepare_weight(weight, kpad, cpad, compute_dtype):
    """Input-independent weight transform -> (Kpad, Cpad).  Can be cached/reused."""
    cout, cin, kh_sz, kw_sz = weight.shape
    k = cin * kh_sz * kw_sz
    w_mat = jnp.transpose(weight.reshape(cout, k).astype(jnp.float32))   # (K, Cout)
    w_mat = jnp.pad(w_mat, ((0, kpad - k), (0, cpad - cout)))
    return w_mat.astype(compute_dtype)


def conv_batch_relu_max(x, weight, bias, *, stride=1, padding=1,
                        pool_k=2, pool_s=2, eps=1e-5,
                        compute_dtype=jnp.float32):
    """Forward of ConvBatchReluMax (training-mode BN batch statistics).

    x: (N, Cin, H, W) NCHW; weight: (Cout, Cin, KH, KW); bias: (Cout,).
    `bias` is accepted for API parity but is mathematically a no-op on the
    module output: BatchNorm(affine=False) subtracts the per-channel batch
    mean immediately after the conv, cancelling the bias exactly.
    `compute_dtype=jnp.bfloat16` enables bf16 MXU operands (v6e/v7x fast path);
    keep the f32 default on v5e.
    """
    del bias  # exact no-op under BatchNorm(affine=False) batch statistics
    n, cin, h, w = x.shape
    cout, _, kh_sz, kw_sz = weight.shape
    # TODO(synk): overlapping / gapped pooling (pool_k != pool_s) not implemented.
    assert pool_k == pool_s, "only non-overlapping max-pool (kernel == stride)"

    ho = (h + 2 * padding - kh_sz) // stride + 1
    wo = (w + 2 * padding - kw_sz) // stride + 1
    hm = (ho - pool_k) // pool_s + 1
    wm = (wo - pool_k) // pool_s + 1
    # TODO(synk): if the pool does not tile Ho/Wo exactly, the dropped border
    # pixels still contribute to the BN batch statistics; they would have to be
    # appended as extra stat-only rows of the patch matrix.
    assert hm * pool_s == ho and wm * pool_s == wo, \
        "max-pool must tile the conv output exactly"

    t = kh_sz * kw_sz
    k = cin * t                                    # folded contraction dim
    m = n * pool_k * pool_k * hm * wm              # == n * ho * wo
    kpad = ((k + 127) // 128) * 128                # lane-dense contraction axis
    cpad = ((cout + 127) // 128) * 128             # lane-dense output channels

    # ---- im2col in the wrapper (tiny tensors; fuses under jit).  Row ordering is
    # (dh, dw, N, Hm, Wm) so the kernel's max-pool reduces over an outer axis.
    xp = jnp.pad(x.astype(jnp.float32),
                 ((0, 0), (0, 0), (padding, padding), (padding, padding)))
    taps = [xp[:, :,
               kh:kh + (ho - 1) * stride + 1:stride,
               kw:kw + (wo - 1) * stride + 1:stride]
            for kh in range(kh_sz) for kw in range(kw_sz)]       # each (N, Cin, Ho, Wo)
    pat = jnp.stack(taps, axis=2).reshape(n, k, ho, wo)          # k-index = c*T + tap
    pat = pat.reshape(n, k, hm, pool_k, wm, pool_k)              # (N, K, Hm, dh, Wm, dw)
    pat = jnp.transpose(pat, (3, 5, 0, 2, 4, 1)).reshape(m, k)   # (M, K), pooled row order
    pat = jnp.pad(pat, ((0, 0), (0, kpad - k))).astype(compute_dtype)

    w_mat = _prepare_weight(weight, kpad, cpad, compute_dtype)   # (Kpad, Cpad)

    kernel = partial(_fused_conv_bn_relu_pool_kernel,
                     n=n, hm=hm, wm=wm, pool_k=pool_k, eps=eps)

    # Whole working set is a few hundred KB, so a single grid-less invocation with
    # everything resident in VMEM is the right shape at this size.
    # TODO(synk): at large N/H/W/Cout, tile the grid over output-channel blocks
    # (BN stats are per-channel, so channel tiling stays exact) with
    # dimension_semantics=("parallel",) and raise vmem_limit_bytes so per-core
    # residency fits v7x's 64 MiB VMEM and both of its TensorCores are used.
    # TODO(synk): for tiny Cout on a hot path, a transposed formulation (weights as
    # LHS -> (Cout, M) output with M on lanes) would cut post-conv VPU/store work
    # by ~Cpad/Cout; not worthwhile at this size.
    out = pl.pallas_call(
        kernel,
        out_shape=jax.ShapeDtypeStruct((n, hm, wm, cpad), jnp.float32),
        in_specs=[pl.BlockSpec(memory_space=pltpu.MemorySpace.VMEM),
                  pl.BlockSpec(memory_space=pltpu.MemorySpace.VMEM)],
        out_specs=pl.BlockSpec(memory_space=pltpu.MemorySpace.VMEM),
    )(pat, w_mat)

    # Drop channel padding and go back to NCHW (tiny; fuses under jit).
    return jnp.transpose(out[..., :cout], (0, 3, 1, 2))


# ---------------------------------------------------------------------------
# Pure-JAX reference (quiet correctness check; includes the bias on purpose)
# ---------------------------------------------------------------------------

def _reference(x, weight, bias, *, stride, padding, pool_k, pool_s, eps=1e-5):
    y0 = jax.lax.conv_general_dilated(
        x, weight, (stride, stride),
        ((padding, padding), (padding, padding)),
        dimension_numbers=("NCHW", "OIHW", "NCHW"),
        precision=jax.lax.Precision.HIGHEST)
    y0 = y0 + bias[None, :, None, None]
    mean = jnp.mean(y0, axis=(0, 2, 3), keepdims=True)
    var = jnp.mean((y0 - mean) ** 2, axis=(0, 2, 3), keepdims=True)
    y1 = (y0 - mean) / jnp.sqrt(var + eps)
    y2 = jnp.maximum(y1, 0.0)
    y3 = jax.lax.reduce_window(y2, -jnp.inf, jax.lax.max,
                               (1, 1, pool_k, pool_k),
                               (1, 1, pool_s, pool_s), "VALID")
    return y3


if __name__ == "__main__":
    # Module hyper-params: in_d=4, out_d=8, kernel_size=3, stride=1, padding=1,
    # max_pool_kernel=2, max_pool_stride=2.  Input: NCHW (2, 4, 16, 16).
    N, Cin, H, W = 2, 4, 16, 16
    Cout, KH = 8, 3
    stride, padding, pool_k, pool_s = 1, 1, 2, 2

    key = jax.random.PRNGKey(0)
    kx, kw_, kb = jax.random.split(key, 3)
    x = jax.random.normal(kx, (N, Cin, H, W), dtype=jnp.float32)
    bound = 1.0 / math.sqrt(Cin * KH * KH)                  # PyTorch conv init range
    weight = jax.random.uniform(kw_, (Cout, Cin, KH, KH), jnp.float32, -bound, bound)
    bias = jax.random.uniform(kb, (Cout,), jnp.float32, -bound, bound)

    fwd = jax.jit(partial(conv_batch_relu_max, stride=stride, padding=padding,
                          pool_k=pool_k, pool_s=pool_s))
    out = jax.block_until_ready(fwd(x, weight, bias))

    Ho = (H + 2 * padding - KH) // stride + 1
    Hm = (Ho - pool_k) // pool_s + 1
    assert out.shape == (N, Cout, Hm, Hm)

    ref = _reference(x, weight, bias, stride=stride, padding=padding,
                     pool_k=pool_k, pool_s=pool_s)
    assert bool(jnp.allclose(out, ref, atol=1e-3, rtol=1e-3))

    # Optional bf16 MXU operand path (v6e / v7x fast path; keep f32 default on v5e).
    # Accumulation is still f32; looser tolerance covers bf16 operand rounding.
    fwd_bf16 = jax.jit(partial(conv_batch_relu_max, stride=stride, padding=padding,
                               pool_k=pool_k, pool_s=pool_s,
                               compute_dtype=jnp.bfloat16))
    out_bf16 = jax.block_until_ready(fwd_bf16(x, weight, bias))
    assert bool(jnp.allclose(out_bf16, ref, atol=5e-2, rtol=5e-2))

    print("KERNEL_OK")
</pallas_src>

<mosaic_0001>
module attributes {stable_mosaic.version = 11 : i64} {
  func.func @_fused_conv_bn_relu_pool_kernel(%arg0: memref<512x128xf32, #tpu.memory_space<vmem>>, %arg1: memref<128x128xf32, #tpu.memory_space<vmem>>, %arg2: memref<2x8x8x128xf32, #tpu.memory_space<vmem>>) attributes {dimension_semantics = [], scalar_prefetch = 0 : i64, scratch_operands = 0 : i64, tpu.core_type = #tpu.core_type<tc>} {
    %c0 = arith.constant 0 : index
    %c0_0 = arith.constant 0 : index
    %0 = vector.load %arg0[%c0, %c0_0] : memref<512x128xf32, #tpu.memory_space<vmem>>, vector<512x128xf32>
    %c0_1 = arith.constant 0 : index
    %c0_2 = arith.constant 0 : index
    %1 = vector.load %arg1[%c0_1, %c0_2] : memref<128x128xf32, #tpu.memory_space<vmem>>, vector<128x128xf32>
    %cst = arith.constant dense<0.000000e+00> : vector<512x128xf32>
    %2 = tpu.matmul %0, %1, %cst {dimension_numbers = #tpu.dot_dimension_numbers<[1], [0], [0], [1], [0, 0, 1, 1], [], []>} : vector<512x128xf32>, vector<128x128xf32>, vector<512x128xf32> -> vector<512x128xf32>
    %cst_3 = arith.constant dense<0.000000e+00> : vector<128xf32>
    %3 = vector.multi_reduction <add>, %2, %cst_3 [0] : vector<512x128xf32> to vector<128xf32>
    %4 = vector.shape_cast %3 : vector<128xf32> to vector<1x128xf32>
    %cst_4 = arith.constant 0.001953125 : f32
    %5 = vector.broadcast %cst_4 : f32 to vector<1x128xf32>
    %6 = arith.mulf %4, %5 : vector<1x128xf32>
    %7 = arith.mulf %2, %2 : vector<512x128xf32>
    %cst_5 = arith.constant dense<0.000000e+00> : vector<128xf32>
    %8 = vector.multi_reduction <add>, %7, %cst_5 [0] : vector<512x128xf32> to vector<128xf32>
    %9 = vector.shape_cast %8 : vector<128xf32> to vector<1x128xf32>
    %cst_6 = arith.constant 0.001953125 : f32
    %10 = vector.broadcast %cst_6 : f32 to vector<1x128xf32>
    %11 = arith.mulf %9, %10 : vector<1x128xf32>
    %12 = arith.mulf %6, %6 : vector<1x128xf32>
    %13 = arith.subf %11, %12 : vector<1x128xf32>
    %14 = vector.broadcast %6 : vector<1x128xf32> to vector<512x128xf32>
    %15 = arith.subf %2, %14 : vector<512x128xf32>
    %cst_7 = arith.constant 9.99999974E-6 : f32
    %16 = vector.broadcast %cst_7 : f32 to vector<1x128xf32>
    %17 = arith.addf %13, %16 : vector<1x128xf32>
    %18 = math.rsqrt %17 : vector<1x128xf32>
    %19 = vector.broadcast %18 : vector<1x128xf32> to vector<512x128xf32>
    %20 = arith.mulf %15, %19 : vector<512x128xf32>
    %cst_8 = arith.constant 0.000000e+00 : f32
    %21 = vector.broadcast %cst_8 : f32 to vector<512x128xf32>
    %22 = arith.maximumf %20, %21 : vector<512x128xf32>
    %23 = vector.shape_cast %22 : vector<512x128xf32> to vector<4x2x8x8x128xf32>
    %24 = vector.extract_strided_slice %23 {offsets = [0, 0, 0, 0, 0], sizes = [1, 2, 8, 8, 128], strides = [1, 1, 1, 1, 1]} : vector<4x2x8x8x128xf32> to vector<1x2x8x8x128xf32>
    %25 = vector.shape_cast %24 : vector<1x2x8x8x128xf32> to vector<2x8x8x128xf32>
    %26 = vector.extract_strided_slice %23 {offsets = [1, 0, 0, 0, 0], sizes = [1, 2, 8, 8, 128], strides = [1, 1, 1, 1, 1]} : vector<4x2x8x8x128xf32> to vector<1x2x8x8x128xf32>
    %27 = vector.shape_cast %26 : vector<1x2x8x8x128xf32> to vector<2x8x8x128xf32>
    %28 = arith.maximumf %25, %27 : vector<2x8x8x128xf32>
    %29 = vector.extract_strided_slice %23 {offsets = [2, 0, 0, 0, 0], sizes = [1, 2, 8, 8, 128], strides = [1, 1, 1, 1, 1]} : vector<4x2x8x8x128xf32> to vector<1x2x8x8x128xf32>
    %30 = vector.shape_cast %29 : vector<1x2x8x8x128xf32> to vector<2x8x8x128xf32>
    %31 = arith.maximumf %28, %30 : vector<2x8x8x128xf32>
    %32 = vector.extract_strided_slice %23 {offsets = [3, 0, 0, 0, 0], sizes = [1, 2, 8, 8, 128], strides = [1, 1, 1, 1, 1]} : vector<4x2x8x8x128xf32> to vector<1x2x8x8x128xf32>
    %33 = vector.shape_cast %32 : vector<1x2x8x8x128xf32> to vector<2x8x8x128xf32>
    %34 = arith.maximumf %31, %33 : vector<2x8x8x128xf32>
    %c0_9 = arith.constant 0 : index
    %c0_10 = arith.constant 0 : index
    %c0_11 = arith.constant 0 : index
    %c0_12 = arith.constant 0 : index
    %35 = vector.load %arg2[%c0_9, %c0_10, %c0_11, %c0_12] : memref<2x8x8x128xf32, #tpu.memory_space<vmem>>, vector<2x8x8x128xf32>
    tpu.vector_store %arg2[%c0_9, %c0_10, %c0_11, %c0_12], %34 {strides = array<i32>} : memref<2x8x8x128xf32, #tpu.memory_space<vmem>>, vector<2x8x8x128xf32>,
    return
  }
}

</mosaic_0001>

<llo_original>
// kernel: conv_batch_relu_max.1
$region0: #{conv_batch_relu_max.1}
  #allocation0 [shape = 'u32[]', space=smem, size = 0x4, offset = 0x4, fixed_abs, tag = 'smem constant byte address 0x4 - core index']
  #allocation1 [shape = 'u32[72,128]{1,0:T(1,128)}', space=vmem, size = 0x9000, scoped, tag = 'internal scratch']
  %s0 = inlined_call_operand.vmem [shape: f32[512,128], index: 0, kind: input, shape index: {}]
  %s1 = inlined_call_operand.vmem [shape: f32[128,128], index: 1, kind: input, shape index: {}]
  %s2 = inlined_call_operand.vmem [shape: f32[2,8,8,128], index: 2, kind: output, shape index: {}]
  %s3 = sld [smem:[#allocation0]]
  $region18: #{conv_batch_relu_max.1} parent=0
    _
  %s5 = ssub.s32 1, %s3
  %s6 = scalar_select 0, %s5, %s3
  // Predicated region
  $region2: #{conv_batch_relu_max.1} parent=0 // pred_check
    _
  $region3: #{conv_batch_relu_max.1} parent=0 // pred_check_branch
    %8 = sbr.rel (0) target = $region5
  $region4: #{conv_batch_relu_max.1} parent=0 // pred_region
    _
  $region5: #{conv_batch_relu_max.1} parent=0 // pred_fallthru
    _
  // Predicated region
  $region6: #{conv_batch_relu_max.1} parent=0 // pred_check
    _
  $region7: #{conv_batch_relu_max.1} parent=0 // pred_check_branch
    %10 = sbr.rel (0) target = $region9
  $region8: #{conv_batch_relu_max.1} parent=0 // pred_region
    _
  $region9: #{conv_batch_relu_max.1} parent=0 // pred_fallthru
    _
  %v11 = vld [vmem:[%s0] sm:$0xff]
  %v12 = vld [vmem:[%s0 + $0x8] sm:$0xff]
  %v13 = vld [vmem:[%s0 + $0x10] sm:$0xff]
  %v14 = vld [vmem:[%s0 + $0x18] sm:$0xff]
  %v15 = vld [vmem:[%s0 + $0x20] sm:$0xff]
  %v16 = vld [vmem:[%s0 + $0x28] sm:$0xff]
  %v17 = vld [vmem:[%s0 + $0x30] sm:$0xff]
  %v18 = vld [vmem:[%s0 + $0x38] sm:$0xff]
  %v19 = vld [vmem:[%s0 + $0x40] sm:$0xff]
  %v20 = vld [vmem:[%s0 + $0x48] sm:$0xff]
  %v21 = vld [vmem:[%s0 + $0x50] sm:$0xff]
  %v22 = vld [vmem:[%s0 + $0x58] sm:$0xff]
  %v23 = vld [vmem:[%s0 + $0x60] sm:$0xff]
  %v24 = vld [vmem:[%s0 + $0x68] sm:$0xff]
  %v25 = vld [vmem:[%s0 + $0x70] sm:$0xff]
  %v26 = vld [vmem:[%s0 + $0x78] sm:$0xff]
  %v27 = vld [vmem:[%s0 + $0x80] sm:$0xff]
  %v28 = vld [vmem:[%s0 + $0x88] sm:$0xff]
  %v29 = vld [vmem:[%s0 + $0x90] sm:$0xff]
  %v30 = vld [vmem:[%s0 + $0x98] sm:$0xff]
  %v31 = vld [vmem:[%s0 + $0xa0] sm:$0xff]
  %v32 = vld [vmem:[%s0 + $0xa8] sm:$0xff]
  %v33 = vld [vmem:[%s0 + $0xb0] sm:$0xff]
  %v34 = vld [vmem:[%s0 + $0xb8] sm:$0xff]
  %v35 = vld [vmem:[%s0 + $0xc0] sm:$0xff]
  %v36 = vld [vmem:[%s0 + $0xc8] sm:$0xff]
  %v37 = vld [vmem:[%s0 + $0xd0] sm:$0xff]
  %v38 = vld [vmem:[%s0 + $0xd8] sm:$0xff]
  %v39 = vld [vmem:[%s0 + $0xe0] sm:$0xff]
  %v40 = vld [vmem:[%s0 + $0xe8] sm:$0xff]
  %v41 = vld [vmem:[%s0 + $0xf0] sm:$0xff]
  %v42 = vld [vmem:[%s0 + $0xf8] sm:$0xff]
  %v43 = vld [vmem:[%s0 + $0x100] sm:$0xff]
  %v44 = vld [vmem:[%s0 + $0x108] sm:$0xff]
  %v45 = vld [vmem:[%s0 + $0x110] sm:$0xff]
  %v46 = vld [vmem:[%s0 + $0x118] sm:$0xff]
  %v47 = vld [vmem:[%s0 + $0x120] sm:$0xff]
  %v48 = vld [vmem:[%s0 + $0x128] sm:$0xff]
  %v49 = vld [vmem:[%s0 + $0x130] sm:$0xff]
  %v50 = vld [vmem:[%s0 + $0x138] sm:$0xff]
  %v51 = vld [vmem:[%s0 + $0x140] sm:$0xff]
  %v52 = vld [vmem:[%s0 + $0x148] sm:$0xff]
  %v53 = vld [vmem:[%s0 + $0x150] sm:$0xff]
  %v54 = vld [vmem:[%s0 + $0x158] sm:$0xff]
  %v55 = vld [vmem:[%s0 + $0x160] sm:$0xff]
  %v56 = vld [vmem:[%s0 + $0x168] sm:$0xff]
  %v57 = vld [vmem:[%s0 + $0x170] sm:$0xff]
  %v58 = vld [vmem:[%s0 + $0x178] sm:$0xff]
  %v59 = vld [vmem:[%s0 + $0x180] sm:$0xff]
  %v60 = vld [vmem:[%s0 + $0x188] sm:$0xff]
  %v61 = vld [vmem:[%s0 + $0x190] sm:$0xff]
  %v62 = vld [vmem:[%s0 + $0x198] sm:$0xff]
  %v63 = vld [vmem:[%s0 + $0x1a0] sm:$0xff]
  %v64 = vld [vmem:[%s0 + $0x1a8] sm:$0xff]
  %v65 = vld [vmem:[%s0 + $0x1b0] sm:$0xff]
  %v66 = vld [vmem:[%s0 + $0x1b8] sm:$0xff]
  %v67 = vld [vmem:[%s0 + $0x1c0] sm:$0xff]
  %v68 = vld [vmem:[%s0 + $0x1c8] sm:$0xff]
  %v69 = vld [vmem:[%s0 + $0x1d0] sm:$0xff]
  %v70 = vld [vmem:[%s0 + $0x1d8] sm:$0xff]
  %v71 = vld [vmem:[%s0 + $0x1e0] sm:$0xff]
  %v72 = vld [vmem:[%s0 + $0x1e8] sm:$0xff]
  %v73 = vld [vmem:[%s0 + $0x1f0] sm:$0xff]
  %v74 = vld [vmem:[%s0 + $0x1f8] sm:$0xff]
  %v75 = vld [vmem:[%s1] sm:$0xff]
  %v76 = vld [vmem:[%s1 + $0x8] sm:$0xff]
  %v77 = vld [vmem:[%s1 + $0x10] sm:$0xff]
  %v78 = vld [vmem:[%s1 + $0x18] sm:$0xff]
  %v79 = vld [vmem:[%s1 + $0x20] sm:$0xff]
  %v80 = vld [vmem:[%s1 + $0x28] sm:$0xff]
  %v81 = vld [vmem:[%s1 + $0x30] sm:$0xff]
  %v82 = vld [vmem:[%s1 + $0x38] sm:$0xff]
  %v83 = vld [vmem:[%s1 + $0x40] sm:$0xff]
  %v84 = vld [vmem:[%s1 + $0x48] sm:$0xff]
  %v85 = vld [vmem:[%s1 + $0x50] sm:$0xff]
  %v86 = vld [vmem:[%s1 + $0x58] sm:$0xff]
  %v87 = vld [vmem:[%s1 + $0x60] sm:$0xff]
  %v88 = vld [vmem:[%s1 + $0x68] sm:$0xff]
  %v89 = vld [vmem:[%s1 + $0x70] sm:$0xff]
  %v90 = vld [vmem:[%s1 + $0x78] sm:$0xff]
  %91 = vmatpush.msra.mxu0 %v90
  %92 = vmatpush.msra.mxu0 %v89
  %93 = vmatpush.msra.mxu0 %v88
  %94 = vmatpush.msra.mxu0 %v87
  %95 = vmatpush.msra.mxu0 %v86
  %96 = vmatpush.msra.mxu0 %v85
  %97 = vmatpush.msra.mxu0 %v84
  %98 = vmatpush.msra.mxu0 %v83
  %99 = vmatpush.msra.mxu0 %v82
  %100 = vmatpush.msra.mxu0 %v81
  %101 = vmatpush.msra.mxu0 %v80
  %102 = vmatpush.msra.mxu0 %v79
  %103 = vmatpush.msra.mxu0 %v78
  %104 = vmatpush.msra.mxu0 %v77
  %105 = vmatpush.msra.mxu0 %v76
  %106 = vmatpush.msra.mxu0 %v75
  %107 = vmatmul.f32.gmra.mxu0 %v11
  %v108 = vpop.f32.mrf.mxu0
  %v109 = vadd.f32 0.0, %v108
  %110 = vmatmul.f32.gmra.mxu0 %v12
  %v111 = vpop.f32.mrf.mxu0
  %v112 = vadd.f32 0.0, %v111
  %113 = vmatmul.f32.gmra.mxu0 %v13
  %v114 = vpop.f32.mrf.mxu0
  %v115 = vadd.f32 0.0, %v114
  %116 = vmatmul.f32.gmra.mxu0 %v14
  %v117 = vpop.f32.mrf.mxu0
  %v118 = vadd.f32 0.0, %v117
  %119 = vmatmul.f32.gmra.mxu0 %v15
  %v120 = vpop.f32.mrf.mxu0
  %v121 = vadd.f32 0.0, %v120
  %122 = vmatmul.f32.gmra.mxu0 %v16
  %v123 = vpop.f32.mrf.mxu0
  %v124 = vadd.f32 0.0, %v123
  %125 = vmatmul.f32.gmra.mxu0 %v17
  %v126 = vpop.f32.mrf.mxu0
  %v127 = vadd.f32 0.0, %v126
  %128 = vmatmul.f32.gmra.mxu0 %v18
  %v129 = vpop.f32.mrf.mxu0
  %v130 = vadd.f32 0.0, %v129
  %131 = vmatmul.f32.gmra.mxu0 %v19
  %v132 = vpop.f32.mrf.mxu0
  %v133 = vadd.f32 0.0, %v132
  %134 = vmatmul.f32.gmra.mxu0 %v20
  %v135 = vpop.f32.mrf.mxu0
  %v136 = vadd.f32 0.0, %v135
  %137 = vmatmul.f32.gmra.mxu0 %v21
  %v138 = vpop.f32.mrf.mxu0
  %v139 = vadd.f32 0.0, %v138
  %140 = vmatmul.f32.gmra.mxu0 %v22
  %v141 = vpop.f32.mrf.mxu0
  %v142 = vadd.f32 0.0, %v141
  %143 = vmatmul.f32.gmra.mxu0 %v23
  %v144 = vpop.f32.mrf.mxu0
  %v145 = vadd.f32 0.0, %v144
  %146 = vmatmul.f32.gmra.mxu0 %v24
  %v147 = vpop.f32.mrf.mxu0
  %v148 = vadd.f32 0.0, %v147
  %149 = vmatmul.f32.gmra.mxu0 %v25
  %v150 = vpop.f32.mrf.mxu0
  %v151 = vadd.f32 0.0, %v150
  %152 = vmatmul.f32.gmra.mxu0 %v26
  %v153 = vpop.f32.mrf.mxu0
  %v154 = vadd.f32 0.0, %v153
  %155 = vmatmul.f32.gmra.mxu0 %v27
  %v156 = vpop.f32.mrf.mxu0
  %v157 = vadd.f32 0.0, %v156
  %158 = vmatmul.f32.gmra.mxu0 %v28
  %v159 = vpop.f32.mrf.mxu0
  %v160 = vadd.f32 0.0, %v159
  %161 = vmatmul.f32.gmra.mxu0 %v29
  %v162 = vpop.f32.mrf.mxu0
  %v163 = vadd.f32 0.0, %v162
  %164 = vmatmul.f32.gmra.mxu0 %v30
  %v165 = vpop.f32.mrf.mxu0
  %v166 = vadd.f32 0.0, %v165
  %167 = vmatmul.f32.gmra.mxu0 %v31
  %v168 = vpop.f32.mrf.mxu0
  %v169 = vadd.f32 0.0, %v168
  %170 = vmatmul.f32.gmra.mxu0 %v32
  %v171 = vpop.f32.mrf.mxu0
  %v172 = vadd.f32 0.0, %v171
  %173 = vmatmul.f32.gmra.mxu0 %v33
  %v174 = vpop.f32.mrf.mxu0
  %v175 = vadd.f32 0.0, %v174
  %176 = vmatmul.f32.gmra.mxu0 %v34
  %v177 = vpop.f32.mrf.mxu0
  %v178 = vadd.f32 0.0, %v177
  %179 = vmatmul.f32.gmra.mxu0 %v35
  %v180 = vpop.f32.mrf.mxu0
  %v181 = vadd.f32 0.0, %v180
  %182 = vmatmul.f32.gmra.mxu0 %v36
  %v183 = vpop.f32.mrf.mxu0
  %v184 = vadd.f32 0.0, %v183
  %185 = vmatmul.f32.gmra.mxu0 %v37
  %v186 = vpop.f32.mrf.mxu0
  %v187 = vadd.f32 0.0, %v186
  %188 = vmatmul.f32.gmra.mxu0 %v38
  %v189 = vpop.f32.mrf.mxu0
  %v190 = vadd.f32 0.0, %v189
  %191 = vmatmul.f32.gmra.mxu0 %v39
  %v192 = vpop.f32.mrf.mxu0
  %v193 = vadd.f32 0.0, %v192
  %194 = vmatmul.f32.gmra.mxu0 %v40
  %v195 = vpop.f32.mrf.mxu0
  %v196 = vadd.f32 0.0, %v195
  %197 = vmatmul.f32.gmra.mxu0 %v41
  %v198 = vpop.f32.mrf.mxu0
  %v199 = vadd.f32 0.0, %v198
  %200 = vmatmul.f32.gmra.mxu0 %v42
  %v201 = vpop.f32.mrf.mxu0
  %v202 = vadd.f32 0.0, %v201
  %203 = vmatmul.f32.gmra.mxu0 %v43
  %v204 = vpop.f32.mrf.mxu0
  %v205 = vadd.f32 0.0, %v204
  %206 = vmatmul.f32.gmra.mxu0 %v44
  %v207 = vpop.f32.mrf.mxu0
  %v208 = vadd.f32 0.0, %v207
  %209 = vmatmul.f32.gmra.mxu0 %v45
  %v210 = vpop.f32.mrf.mxu0
  %v211 = vadd.f32 0.0, %v210
  %212 = vmatmul.f32.gmra.mxu0 %v46
  %v213 = vpop.f32.mrf.mxu0
  %v214 = vadd.f32 0.0, %v213
  %215 = vmatmul.f32.gmra.mxu0 %v47
  %v216 = vpop.f32.mrf.mxu0
  %v217 = vadd.f32 0.0, %v216
  %218 = vmatmul.f32.gmra.mxu0 %v48
  %v219 = vpop.f32.mrf.mxu0
  %v220 = vadd.f32 0.0, %v219
  %221 = vmatmul.f32.gmra.mxu0 %v49
  %v222 = vpop.f32.mrf.mxu0
  %v223 = vadd.f32 0.0, %v222
  %224 = vmatmul.f32.gmra.mxu0 %v50
  %v225 = vpop.f32.mrf.mxu0
  %v226 = vadd.f32 0.0, %v225
  %227 = vmatmul.f32.gmra.mxu0 %v51
  %v228 = vpop.f32.mrf.mxu0
  %v229 = vadd.f32 0.0, %v228
  %230 = vmatmul.f32.gmra.mxu0 %v52
  %v231 = vpop.f32.mrf.mxu0
  %v232 = vadd.f32 0.0, %v231
  %233 = vmatmul.f32.gmra.mxu0 %v53
  %v234 = vpop.f32.mrf.mxu0
  %v235 = vadd.f32 0.0, %v234
  %236 = vmatmul.f32.gmra.mxu0 %v54
  %v237 = vpop.f32.mrf.mxu0
  %v238 = vadd.f32 0.0, %v237
  %239 = vmatmul.f32.gmra.mxu0 %v55
  %v240 = vpop.f32.mrf.mxu0
  %v241 = vadd.f32 0.0, %v240
  %242 = vmatmul.f32.gmra.mxu0 %v56
  %v243 = vpop.f32.mrf.mxu0
  %v244 = vadd.f32 0.0, %v243
  %245 = vmatmul.f32.gmra.mxu0 %v57
  %v246 = vpop.f32.mrf.mxu0
  %v247 = vadd.f32 0.0, %v246
  %248 = vmatmul.f32.gmra.mxu0 %v58
  %v249 = vpop.f32.mrf.mxu0
  %v250 = vadd.f32 0.0, %v249
  %251 = vmatmul.f32.gmra.mxu0 %v59
  %v252 = vpop.f32.mrf.mxu0
  %v253 = vadd.f32 0.0, %v252
  %254 = vmatmul.f32.gmra.mxu0 %v60
  %v255 = vpop.f32.mrf.mxu0
  %v256 = vadd.f32 0.0, %v255
  %257 = vmatmul.f32.gmra.mxu0 %v61
  %v258 = vpop.f32.mrf.mxu0
  %v259 = vadd.f32 0.0, %v258
  %260 = vmatmul.f32.gmra.mxu0 %v62
  %v261 = vpop.f32.mrf.mxu0
  %v262 = vadd.f32 0.0, %v261
  %263 = vmatmul.f32.gmra.mxu0 %v63
  %v264 = vpop.f32.mrf.mxu0
  %v265 = vadd.f32 0.0, %v264
  %266 = vmatmul.f32.gmra.mxu0 %v64
  %v267 = vpop.f32.mrf.mxu0
  %v268 = vadd.f32 0.0, %v267
  %269 = vmatmul.f32.gmra.mxu0 %v65
  %v270 = vpop.f32.mrf.mxu0
  %v271 = vadd.f32 0.0, %v270
  %272 = vmatmul.f32.gmra.mxu0 %v66
  %v273 = vpop.f32.mrf.mxu0
  %v274 = vadd.f32 0.0, %v273
  %275 = vmatmul.f32.gmra.mxu0 %v67
  %v276 = vpop.f32.mrf.mxu0
  %v277 = vadd.f32 0.0, %v276
  %278 = vmatmul.f32.gmra.mxu0 %v68
  %v279 = vpop.f32.mrf.mxu0
  %v280 = vadd.f32 0.0, %v279
  %281 = vmatmul.f32.gmra.mxu0 %v69
  %v282 = vpop.f32.mrf.mxu0
  %v283 = vadd.f32 0.0, %v282
  %284 = vmatmul.f32.gmra.mxu0 %v70
  %v285 = vpop.f32.mrf.mxu0
  %v286 = vadd.f32 0.0, %v285
  %287 = vmatmul.f32.gmra.mxu0 %v71
  %v288 = vpop.f32.mrf.mxu0
  %v289 = vadd.f32 0.0, %v288
  %290 = vmatmul.f32.gmra.mxu0 %v72
  %v291 = vpop.f32.mrf.mxu0
  %v292 = vadd.f32 0.0, %v291
  %293 = vmatmul.f32.gmra.mxu0 %v73
  %v294 = vpop.f32.mrf.mxu0
  %v295 = vadd.f32 0.0, %v294
  %296 = vmatmul.f32.gmra.mxu0 %v74
  %v297 = vpop.f32.mrf.mxu0
  %v298 = vadd.f32 0.0, %v297
  %299 = vdwg.mxu0
  %v300 = vadd.f32 %v109, %v112
  %v301 = vadd.f32 %v300, %v115
  %v302 = vadd.f32 %v301, %v118
  %v303 = vadd.f32 %v302, %v121
  %v304 = vadd.f32 %v303, %v124
  %v305 = vadd.f32 %v304, %v127
  %v306 = vadd.f32 %v305, %v130
  %v307 = vadd.f32 %v306, %v133
  %v308 = vadd.f32 %v307, %v136
  %v309 = vadd.f32 %v308, %v139
  %v310 = vadd.f32 %v309, %v142
  %v311 = vadd.f32 %v310, %v145
  %v312 = vadd.f32 %v311, %v148
  %v313 = vadd.f32 %v312, %v151
  %v314 = vadd.f32 %v313, %v154
  %v315 = vadd.f32 %v314, %v157
  %v316 = vadd.f32 %v315, %v160
  %v317 = vadd.f32 %v316, %v163
  %v318 = vadd.f32 %v317, %v166
  %v319 = vadd.f32 %v318, %v169
  %v320 = vadd.f32 %v319, %v172
  %v321 = vadd.f32 %v320, %v175
  %v322 = vadd.f32 %v321, %v178
  %v323 = vadd.f32 %v322, %v181
  %v324 = vadd.f32 %v323, %v184
  %v325 = vadd.f32 %v324, %v187
  %v326 = vadd.f32 %v325, %v190
  %v327 = vadd.f32 %v326, %v193
  %v328 = vadd.f32 %v327, %v196
  %v329 = vadd.f32 %v328, %v199
  %v330 = vadd.f32 %v329, %v202
  %v331 = vadd.f32 %v330, %v205
  %v332 = vadd.f32 %v331, %v208
  %v333 = vadd.f32 %v332, %v211
  %v334 = vadd.f32 %v333, %v214
  %v335 = vadd.f32 %v334, %v217
  %v336 = vadd.f32 %v335, %v220
  %v337 = vadd.f32 %v336, %v223
  %v338 = vadd.f32 %v337, %v226
  %v339 = vadd.f32 %v338, %v229
  %v340 = vadd.f32 %v339, %v232
  %v341 = vadd.f32 %v340, %v235
  %v342 = vadd.f32 %v341, %v238
  %v343 = vadd.f32 %v342, %v241
  %v344 = vadd.f32 %v343, %v244
  %v345 = vadd.f32 %v344, %v247
  %v346 = vadd.f32 %v345, %v250
  %v347 = vadd.f32 %v346, %v253
  %v348 = vadd.f32 %v347, %v256
  %v349 = vadd.f32 %v348, %v259
  %v350 = vadd.f32 %v349, %v262
  %v351 = vadd.f32 %v350, %v265
  %v352 = vadd.f32 %v351, %v268
  %v353 = vadd.f32 %v352, %v271
  %v354 = vadd.f32 %v353, %v274
  %v355 = vadd.f32 %v354, %v277
  %v356 = vadd.f32 %v355, %v280
  %v357 = vadd.f32 %v356, %v283
  %v358 = vadd.f32 %v357, %v286
  %v359 = vadd.f32 %v358, %v289
  %v360 = vadd.f32 %v359, %v292
  %v361 = vadd.f32 %v360, %v295
  %v362 = vadd.f32 %v361, %v298
  %v363 = vrot.slane %v362, 4
  %v364 = vadd.f32 %v362, %v363
  %v365 = vrot.slane %v364, 2
  %v366 = vadd.f32 %v364, %v365
  %v367 = vrot.slane %v366, 1
  %v368 = vadd.f32 %v366, %v367
  %v369 = vmul.f32 %v368, 0.001953125
  %v370 = vmul.f32 %v109, %v109
  %v371 = vmul.f32 %v112, %v112
  %v372 = vmul.f32 %v115, %v115
  %v373 = vmul.f32 %v118, %v118
  %v374 = vmul.f32 %v121, %v121
  %v375 = vmul.f32 %v124, %v124
  %v376 = vmul.f32 %v127, %v127
  %v377 = vmul.f32 %v130, %v130
  %v378 = vmul.f32 %v133, %v133
  %v379 = vmul.f32 %v136, %v136
  %v380 = vmul.f32 %v139, %v139
  %v381 = vmul.f32 %v142, %v142
  %v382 = vmul.f32 %v145, %v145
  %v383 = vmul.f32 %v148, %v148
  %v384 = vmul.f32 %v151, %v151
  %v385 = vmul.f32 %v154, %v154
  %v386 = vmul.f32 %v157, %v157
  %v387 = vmul.f32 %v160, %v160
  %v388 = vmul.f32 %v163, %v163
  %v389 = vmul.f32 %v166, %v166
  %v390 = vmul.f32 %v169, %v169
  %v391 = vmul.f32 %v172, %v172
  %v392 = vmul.f32 %v175, %v175
  %v393 = vmul.f32 %v178, %v178
  %v394 = vmul.f32 %v181, %v181
  %v395 = vmul.f32 %v184, %v184
  %v396 = vmul.f32 %v187, %v187
  %v397 = vmul.f32 %v190, %v190
  %v398 = vmul.f32 %v193, %v193
  %v399 = vmul.f32 %v196, %v196
  %v400 = vmul.f32 %v199, %v199
  %v401 = vmul.f32 %v202, %v202
  %v402 = vmul.f32 %v205, %v205
  %v403 = vmul.f32 %v208, %v208
  %v404 = vmul.f32 %v211, %v211
  %v405 = vmul.f32 %v214, %v214
  %v406 = vmul.f32 %v217, %v217
  %v407 = vmul.f32 %v220, %v220
  %v408 = vmul.f32 %v223, %v223
  %v409 = vmul.f32 %v226, %v226
  %v410 = vmul.f32 %v229, %v229
  %v411 = vmul.f32 %v232, %v232
  %v412 = vmul.f32 %v235, %v235
  %v413 = vmul.f32 %v238, %v238
  %v414 = vmul.f32 %v241, %v241
  %v415 = vmul.f32 %v244, %v244
  %v416 = vmul.f32 %v247, %v247
  %v417 = vmul.f32 %v250, %v250
  %v418 = vmul.f32 %v253, %v253
  %v419 = vmul.f32 %v256, %v256
  %v420 = vmul.f32 %v259, %v259
  %v421 = vmul.f32 %v262, %v262
  %v422 = vmul.f32 %v265, %v265
  %v423 = vmul.f32 %v268, %v268
  %v424 = vmul.f32 %v271, %v271
  %v425 = vmul.f32 %v274, %v274
  %v426 = vmul.f32 %v277, %v277
  %v427 = vmul.f32 %v280, %v280
  %v428 = vmul.f32 %v283, %v283
  %v429 = vmul.f32 %v286, %v286
  %v430 = vmul.f32 %v289, %v289
  %v431 = vmul.f32 %v292, %v292
  %v432 = vmul.f32 %v295, %v295
  %v433 = vmul.f32 %v298, %v298
  %v434 = vadd.f32 %v370, %v371
  %v435 = vadd.f32 %v434, %v372
  %v436 = vadd.f32 %v435, %v373
  %v437 = vadd.f32 %v436, %v374
  %v438 = vadd.f32 %v437, %v375
  %v439 = vadd.f32 %v438, %v376
  %v440 = vadd.f32 %v439, %v377
  %v441 = vadd.f32 %v440, %v378
  %v442 = vadd.f32 %v441, %v379
  %v443 = vadd.f32 %v442, %v380
  %v444 = vadd.f32 %v443, %v381
  %v445 = vadd.f32 %v444, %v382
  %v446 = vadd.f32 %v445, %v383
  %v447 = vadd.f32 %v446, %v384
  %v448 = vadd.f32 %v447, %v385
  %v449 = vadd.f32 %v448, %v386
  %v450 = vadd.f32 %v449, %v387
  %v451 = vadd.f32 %v450, %v388
  %v452 = vadd.f32 %v451, %v389
  %v453 = vadd.f32 %v452, %v390
  %v454 = vadd.f32 %v453, %v391
  %v455 = vadd.f32 %v454, %v392
  %v456 = vadd.f32 %v455, %v393
  %v457 = vadd.f32 %v456, %v394
  %v458 = vadd.f32 %v457, %v395
  %v459 = vadd.f32 %v458, %v396
  %v460 = vadd.f32 %v459, %v397
  %v461 = vadd.f32 %v460, %v398
  %v462 = vadd.f32 %v461, %v399
  %v463 = vadd.f32 %v462, %v400
  %v464 = vadd.f32 %v463, %v401
  %v465 = vadd.f32 %v464, %v402
  %v466 = vadd.f32 %v465, %v403
  %v467 = vadd.f32 %v466, %v404
  %v468 = vadd.f32 %v467, %v405
  %v469 = vadd.f32 %v468, %v406
  %v470 = vadd.f32 %v469, %v407
  %v471 = vadd.f32 %v470, %v408
  %v472 = vadd.f32 %v471, %v409
  %v473 = vadd.f32 %v472, %v410
  %v474 = vadd.f32 %v473, %v411
  %v475 = vadd.f32 %v474, %v412
  %v476 = vadd.f32 %v475, %v413
  %v477 = vadd.f32 %v476, %v414
  %v478 = vadd.f32 %v477, %v415
  %v479 = vadd.f32 %v478, %v416
  %v480 = vadd.f32 %v479, %v417
  %v481 = vadd.f32 %v480, %v418
  %v482 = vadd.f32 %v481, %v419
  %v483 = vadd.f32 %v482, %v420
  %v484 = vadd.f32 %v483, %v421
  %v485 = vadd.f32 %v484, %v422
  %v486 = vadd.f32 %v485, %v423
  %v487 = vadd.f32 %v486, %v424
  %v488 = vadd.f32 %v487, %v425
  %v489 = vadd.f32 %v488, %v426
  %v490 = vadd.f32 %v489, %v427
  %v491 = vadd.f32 %v490, %v428
  %v492 = vadd.f32 %v491, %v429
  %v493 = vadd.f32 %v492, %v430
  %v494 = vadd.f32 %v493, %v431
  %v495 = vadd.f32 %v494, %v432
  %v496 = vadd.f32 %v495, %v433
  %v497 = vrot.slane %v496, 4
  %v498 = vadd.f32 %v496, %v497
  %v499 = vrot.slane %v498, 2
  %v500 = vadd.f32 %v498, %v499
  %v501 = vrot.slane %v500, 1
  %v502 = vadd.f32 %v500, %v501
  %v503 = vmul.f32 %v502, 0.001953125
  %v504 = vmul.f32 %v369, %v369
  %v505 = vsub.f32 %v503, %v504
  %v506 = vsub.f32 %v109, %v369
  %v507 = vsub.f32 %v112, %v369
  %v508 = vsub.f32 %v115, %v369
  %v509 = vsub.f32 %v118, %v369
  %v510 = vsub.f32 %v121, %v369
  %v511 = vsub.f32 %v124, %v369
  %v512 = vsub.f32 %v127, %v369
  %v513 = vsub.f32 %v130, %v369
  %v514 = vsub.f32 %v133, %v369
  %v515 = vsub.f32 %v136, %v369
  %v516 = vsub.f32 %v139, %v369
  %v517 = vsub.f32 %v142, %v369
  %v518 = vsub.f32 %v145, %v369
  %v519 = vsub.f32 %v148, %v369
  %v520 = vsub.f32 %v151, %v369
  %v521 = vsub.f32 %v154, %v369
  %v522 = vsub.f32 %v157, %v369
  %v523 = vsub.f32 %v160, %v369
  %v524 = vsub.f32 %v163, %v369
  %v525 = vsub.f32 %v166, %v369
  %v526 = vsub.f32 %v169, %v369
  %v527 = vsub.f32 %v172, %v369
  %v528 = vsub.f32 %v175, %v369
  %v529 = vsub.f32 %v178, %v369
  %v530 = vsub.f32 %v181, %v369
  %v531 = vsub.f32 %v184, %v369
  %v532 = vsub.f32 %v187, %v369
  %v533 = vsub.f32 %v190, %v369
  %v534 = vsub.f32 %v193, %v369
  %v535 = vsub.f32 %v196, %v369
  %v536 = vsub.f32 %v199, %v369
  %v537 = vsub.f32 %v202, %v369
  %v538 = vsub.f32 %v205, %v369
  %v539 = vsub.f32 %v208, %v369
  %v540 = vsub.f32 %v211, %v369
  %v541 = vsub.f32 %v214, %v369
  %v542 = vsub.f32 %v217, %v369
  %v543 = vsub.f32 %v220, %v369
  %v544 = vsub.f32 %v223, %v369
  %v545 = vsub.f32 %v226, %v369
  %v546 = vsub.f32 %v229, %v369
  %v547 = vsub.f32 %v232, %v369
  %v548 = vsub.f32 %v235, %v369
  %v549 = vsub.f32 %v238, %v369
  %v550 = vsub.f32 %v241, %v369
  %v551 = vsub.f32 %v244, %v369
  %v552 = vsub.f32 %v247, %v369
  %v553 = vsub.f32 %v250, %v369
  %v554 = vsub.f32 %v253, %v369
  %v555 = vsub.f32 %v256, %v369
  %v556 = vsub.f32 %v259, %v369
  %v557 = vsub.f32 %v262, %v369
  %v558 = vsub.f32 %v265, %v369
  %v559 = vsub.f32 %v268, %v369
  %v560 = vsub.f32 %v271, %v369
  %v561 = vsub.f32 %v274, %v369
  %v562 = vsub.f32 %v277, %v369
  %v563 = vsub.f32 %v280, %v369
  %v564 = vsub.f32 %v283, %v369
  %v565 = vsub.f32 %v286, %v369
  %v566 = vsub.f32 %v289, %v369
  %v567 = vsub.f32 %v292, %v369
  %v568 = vsub.f32 %v295, %v369
  %v569 = vsub.f32 %v298, %v369
  %v570 = vadd.f32 %v505, 1e-05
  %v571 = vrsqrt.pop %v570
  %v572 = vmul.f32 %v571, %v570
  %v573 = vmul.f32 %v572, %v571
  %v574 = vmul.f32 0.5, %v573
  %v575 = vsub.f32 1.5, %v574
  %v576 = vmul.f32 %v571, %v575
  %vm577 = vweird.f32 %v570
  %vm578 = vweird.f32 %v571
  %vm579 = vmor %vm577, %vm578
  %v580 = vsel %vm579, %v571, %v576
  %v581 = vmul.f32 %v506, %v580
  %v582 = vmul.f32 %v507, %v580
  %v583 = vmul.f32 %v508, %v580
  %v584 = vmul.f32 %v509, %v580
  %v585 = vmul.f32 %v510, %v580
  %v586 = vmul.f32 %v511, %v580
  %v587 = vmul.f32 %v512, %v580
  %v588 = vmul.f32 %v513, %v580
  %v589 = vmul.f32 %v514, %v580
  %v590 = vmul.f32 %v515, %v580
  %v591 = vmul.f32 %v516, %v580
  %v592 = vmul.f32 %v517, %v580
  %v593 = vmul.f32 %v518, %v580
  %v594 = vmul.f32 %v519, %v580
  %v595 = vmul.f32 %v520, %v580
  %v596 = vmul.f32 %v521, %v580
  %v597 = vmul.f32 %v522, %v580
  %v598 = vmul.f32 %v523, %v580
  %v599 = vmul.f32 %v524, %v580
  %v600 = vmul.f32 %v525, %v580
  %v601 = vmul.f32 %v526, %v580
  %v602 = vmul.f32 %v527, %v580
  %v603 = vmul.f32 %v528, %v580
  %v604 = vmul.f32 %v529, %v580
  %v605 = vmul.f32 %v530, %v580
  %v606 = vmul.f32 %v531, %v580
  %v607 = vmul.f32 %v532, %v580
  %v608 = vmul.f32 %v533, %v580
  %v609 = vmul.f32 %v534, %v580
  %v610 = vmul.f32 %v535, %v580
  %v611 = vmul.f32 %v536, %v580
  %v612 = vmul.f32 %v537, %v580
  %v613 = vmul.f32 %v538, %v580
  %v614 = vmul.f32 %v539, %v580
  %v615 = vmul.f32 %v540, %v580
  %v616 = vmul.f32 %v541, %v580
  %v617 = vmul.f32 %v542, %v580
  %v618 = vmul.f32 %v543, %v580
  %v619 = vmul.f32 %v544, %v580
  %v620 = vmul.f32 %v545, %v580
  %v621 = vmul.f32 %v546, %v580
  %v622 = vmul.f32 %v547, %v580
  %v623 = vmul.f32 %v548, %v580
  %v624 = vmul.f32 %v549, %v580
  %v625 = vmul.f32 %v550, %v580
  %v626 = vmul.f32 %v551, %v580
  %v627 = vmul.f32 %v552, %v580
  %v628 = vmul.f32 %v553, %v580
  %v629 = vmul.f32 %v554, %v580
  %v630 = vmul.f32 %v555, %v580
  %v631 = vmul.f32 %v556, %v580
  %v632 = vmul.f32 %v557, %v580
  %v633 = vmul.f32 %v558, %v580
  %v634 = vmul.f32 %v559, %v580
  %v635 = vmul.f32 %v560, %v580
  %v636 = vmul.f32 %v561, %v580
  %v637 = vmul.f32 %v562, %v580
  %v638 = vmul.f32 %v563, %v580
  %v639 = vmul.f32 %v564, %v580
  %v640 = vmul.f32 %v565, %v580
  %v641 = vmul.f32 %v566, %v580
  %v642 = vmul.f32 %v567, %v580
  %v643 = vmul.f32 %v568, %v580
  %v644 = vmul.f32 %v569, %v580
  %v645 = vmax.f32 %v581, 0.0
  %v646 = vmax.f32 %v582, 0.0
  %v647 = vmax.f32 %v583, 0.0
  %v648 = vmax.f32 %v584, 0.0
  %v649 = vmax.f32 %v585, 0.0
  %v650 = vmax.f32 %v586, 0.0
  %v651 = vmax.f32 %v587, 0.0
  %v652 = vmax.f32 %v588, 0.0
  %v653 = vmax.f32 %v589, 0.0
  %v654 = vmax.f32 %v590, 0.0
  %v655 = vmax.f32 %v591, 0.0
  %v656 = vmax.f32 %v592, 0.0
  %v657 = vmax.f32 %v593, 0.0
  %v658 = vmax.f32 %v594, 0.0
  %v659 = vmax.f32 %v595, 0.0
  %v660 = vmax.f32 %v596, 0.0
  %v661 = vmax.f32 %v597, 0.0
  %v662 = vmax.f32 %v598, 0.0
  %v663 = vmax.f32 %v599, 0.0
  %v664 = vmax.f32 %v600, 0.0
  %v665 = vmax.f32 %v601, 0.0
  %v666 = vmax.f32 %v602, 0.0
  %v667 = vmax.f32 %v603, 0.0
  %v668 = vmax.f32 %v604, 0.0
  %v669 = vmax.f32 %v605, 0.0
  %v670 = vmax.f32 %v606, 0.0
  %v671 = vmax.f32 %v607, 0.0
  %v672 = vmax.f32 %v608, 0.0
  %v673 = vmax.f32 %v609, 0.0
  %v674 = vmax.f32 %v610, 0.0
  %v675 = vmax.f32 %v611, 0.0
  %v676 = vmax.f32 %v612, 0.0
  %v677 = vmax.f32 %v613, 0.0
  %v678 = vmax.f32 %v614, 0.0
  %v679 = vmax.f32 %v615, 0.0
  %v680 = vmax.f32 %v616, 0.0
  %v681 = vmax.f32 %v617, 0.0
  %v682 = vmax.f32 %v618, 0.0
  %v683 = vmax.f32 %v619, 0.0
  %v684 = vmax.f32 %v620, 0.0
  %v685 = vmax.f32 %v621, 0.0
  %v686 = vmax.f32 %v622, 0.0
  %v687 = vmax.f32 %v623, 0.0
  %v688 = vmax.f32 %v624, 0.0
  %v689 = vmax.f32 %v625, 0.0
  %v690 = vmax.f32 %v626, 0.0
  %v691 = vmax.f32 %v627, 0.0
  %v692 = vmax.f32 %v628, 0.0
  %v693 = vmax.f32 %v629, 0.0
  %v694 = vmax.f32 %v630, 0.0
  %v695 = vmax.f32 %v631, 0.0
  %v696 = vmax.f32 %v632, 0.0
  %v697 = vmax.f32 %v633, 0.0
  %v698 = vmax.f32 %v634, 0.0
  %v699 = vmax.f32 %v635, 0.0
  %v700 = vmax.f32 %v636, 0.0
  %v701 = vmax.f32 %v637, 0.0
  %v702 = vmax.f32 %v638, 0.0
  %v703 = vmax.f32 %v639, 0.0
  %v704 = vmax.f32 %v640, 0.0
  %v705 = vmax.f32 %v641, 0.0
  %v706 = vmax.f32 %v642, 0.0
  %v707 = vmax.f32 %v643, 0.0
  %v708 = vmax.f32 %v644, 0.0
  %v709 = vmax.f32 %v645, %v661
  %v710 = vmax.f32 %v646, %v662
  %v711 = vmax.f32 %v647, %v663
  %v712 = vmax.f32 %v648, %v664
  %v713 = vmax.f32 %v649, %v665
  %v714 = vmax.f32 %v650, %v666
  %v715 = vmax.f32 %v651, %v667
  %v716 = vmax.f32 %v652, %v668
  %v717 = vmax.f32 %v653, %v669
  %v718 = vmax.f32 %v654, %v670
  %v719 = vmax.f32 %v655, %v671
  %v720 = vmax.f32 %v656, %v672
  %v721 = vmax.f32 %v657, %v673
  %v722 = vmax.f32 %v658, %v674
  %v723 = vmax.f32 %v659, %v675
  %v724 = vmax.f32 %v660, %v676
  %v725 = vmax.f32 %v709, %v677
  %v726 = vmax.f32 %v710, %v678
  %v727 = vmax.f32 %v711, %v679
  %v728 = vmax.f32 %v712, %v680
  %v729 = vmax.f32 %v713, %v681
  %v730 = vmax.f32 %v714, %v682
  %v731 = vmax.f32 %v715, %v683
  %v732 = vmax.f32 %v716, %v684
  %v733 = vmax.f32 %v717, %v685
  %v734 = vmax.f32 %v718, %v686
  %v735 = vmax.f32 %v719, %v687
  %v736 = vmax.f32 %v720, %v688
  %v737 = vmax.f32 %v721, %v689
  %v738 = vmax.f32 %v722, %v690
  %v739 = vmax.f32 %v723, %v691
  %v740 = vmax.f32 %v724, %v692
  %v741 = vmax.f32 %v725, %v693
  %v742 = vmax.f32 %v726, %v694
  %v743 = vmax.f32 %v727, %v695
  %v744 = vmax.f32 %v728, %v696
  %v745 = vmax.f32 %v729, %v697
  %v746 = vmax.f32 %v730, %v698
  %v747 = vmax.f32 %v731, %v699
  %v748 = vmax.f32 %v732, %v700
  %v749 = vmax.f32 %v733, %v701
  %v750 = vmax.f32 %v734, %v702
  %v751 = vmax.f32 %v735, %v703
  %v752 = vmax.f32 %v736, %v704
  %v753 = vmax.f32 %v737, %v705
  %v754 = vmax.f32 %v738, %v706
  %v755 = vmax.f32 %v739, %v707
  %v756 = vmax.f32 %v740, %v708
  %757 = vst [vmem:[%s2] sm:$0xff] %v741
  %758 = vst [vmem:[%s2 + $0x8] sm:$0xff] %v742
  %759 = vst [vmem:[%s2 + $0x10] sm:$0xff] %v743
  %760 = vst [vmem:[%s2 + $0x18] sm:$0xff] %v744
  %761 = vst [vmem:[%s2 + $0x20] sm:$0xff] %v745
  %762 = vst [vmem:[%s2 + $0x28] sm:$0xff] %v746
  %763 = vst [vmem:[%s2 + $0x30] sm:$0xff] %v747
  %764 = vst [vmem:[%s2 + $0x38] sm:$0xff] %v748
  %765 = vst [vmem:[%s2 + $0x40] sm:$0xff] %v749
  %766 = vst [vmem:[%s2 + $0x48] sm:$0xff] %v750
  %767 = vst [vmem:[%s2 + $0x50] sm:$0xff] %v751
  %768 = vst [vmem:[%s2 + $0x58] sm:$0xff] %v752
  %769 = vst [vmem:[%s2 + $0x60] sm:$0xff] %v753
  %770 = vst [vmem:[%s2 + $0x68] sm:$0xff] %v754
  %771 = vst [vmem:[%s2 + $0x70] sm:$0xff] %v755
  %772 = vst [vmem:[%s2 + $0x78] sm:$0xff] %v756
  // Predicated region
  $region10: #{conv_batch_relu_max.1} parent=0 // pred_check
    _
  $region11: #{conv_batch_relu_max.1} parent=0 // pred_check_branch
    %774 = sbr.rel (0) target = $region13
  $region12: #{conv_batch_relu_max.1} parent=0 // pred_region
    _
  $region13: #{conv_batch_relu_max.1} parent=0 // pred_fallthru
    _
  // Predicated region
  $region14: #{conv_batch_relu_max.1} parent=0 // pred_check
    _
  $region15: #{conv_batch_relu_max.1} parent=0 // pred_check_branch
    %776 = sbr.rel (0) target = $region17
  $region16: #{conv_batch_relu_max.1} parent=0 // pred_region
    _
  $region17: #{conv_batch_relu_max.1} parent=0 // pred_fallthru
    _

</llo_original>
